<compile_context>
chip_gen: v6e
topology: v6e:2x2x1
jax: 0.10.0
libtpu: 0.0.40
codegen_flags: <defaults>
</compile_context>

<pallas_src>
import functools

import jax
import jax.numpy as jnp
from jax import lax
from jax.experimental import pallas as pl
from jax.experimental.pallas import tpu as pltpu


def _round_up(n, m):
    return ((n + m - 1) // m) * m


def _block_diag(a, b):
    """[[a, 0], [0, b]] with matching-dtype zeros."""
    top = jnp.concatenate(
        [a, jnp.zeros((a.shape[0], b.shape[1]), a.dtype)], axis=1)
    bot = jnp.concatenate(
        [jnp.zeros((b.shape[0], a.shape[1]), b.dtype), b], axis=1)
    return jnp.concatenate([top, bot], axis=0)


def _actor_critic_fused_kernel(
    x_ref,
    w1_ref, b1_ref, w2_ref, b2_ref, w3_ref, b3_ref, w4_ref, b4_ref,
    out_ref,
    *, num_actions,
):
    compute_dtype = w1_ref.dtype
    x = x_ref[...].astype(compute_dtype)

    # Fused critic+actor MLP (accumulation / biases / ReLU in f32).
    h = jnp.maximum(
        jnp.dot(x, w1_ref[...], preferred_element_type=jnp.float32)
        + b1_ref[...], 0.0)
    h = jnp.maximum(
        jnp.dot(h.astype(compute_dtype), w2_ref[...],
                preferred_element_type=jnp.float32) + b2_ref[...], 0.0)
    h = jnp.maximum(
        jnp.dot(h.astype(compute_dtype), w3_ref[...],
                preferred_element_type=jnp.float32) + b3_ref[...], 0.0)
    out = (jnp.dot(h.astype(compute_dtype), w4_ref[...],
                   preferred_element_type=jnp.float32) + b4_ref[...])
    # out: [TILE_B, OUT_PAD] f32; col 0 = value, cols 1..A = actor logits,
    # remaining columns are zero padding.

    col = lax.broadcasted_iota(jnp.int32, out.shape, 1)
    is_logit = (col >= 1) & (col <= num_actions)

    # Masked softmax over the logit columns only.  exp(masked - m) is already
    # exactly 0 on the value/padding columns (masked = -1e30), so no extra
    # select is needed and exp never sees the unmasked value column.
    masked = jnp.where(is_logit, out, jnp.float32(-1e30))
    m = jnp.max(masked, axis=-1, keepdims=True)
    e = jnp.exp(masked - m)
    denom = jnp.sum(e, axis=-1, keepdims=True)
    mu = e * pl.reciprocal(denom, approx=True)   # EUP path, ~1e-3 rel error

    # Lane-dense packed store: value in col 0, mu in cols 1..A, zeros elsewhere.
    out_ref[...] = jnp.where(col == 0, out, mu).astype(out_ref.dtype)


def actor_critic_forward(x, params, *, tile_b=2048,
                         compute_dtype=jnp.bfloat16,
                         out_dtype=jnp.bfloat16):
    """x: [B, D_in].  Returns (mu [B,A], std [B,A], value [B,1]) in f32.

    compute_dtype: matmul input dtype (bf16 = MXU-native fast path; pass
      jnp.float32 for a bit-accurate critic value).
    out_dtype: dtype of the packed [B, 128] output slab written to HBM.
    """
    B, d_in = x.shape
    A = params["aw4"].shape[1]
    H = params["cw1"].shape[1]

    # ---- Fuse actor + critic into one matmul chain (done once, in JAX). ----
    w1 = jnp.concatenate([params["cw1"], params["aw1"]], axis=1)    # [D, 2H]
    b1 = jnp.concatenate([params["cb1"], params["ab1"]], axis=1)    # [1, 2H]
    w2 = _block_diag(params["cw2"], params["aw2"])                  # [2H, 128]
    b2 = jnp.concatenate([params["cb2"], params["ab2"]], axis=1)
    w3 = _block_diag(params["cw3"], params["aw3"])                  # [128, 64]
    b3 = jnp.concatenate([params["cb3"], params["ab3"]], axis=1)
    w4 = _block_diag(params["cw4"], params["aw4"])                  # [64, 1+A]
    b4 = jnp.concatenate([params["cb4"], params["ab4"]], axis=1)

    # Pad the last layer to a lane-dense (multiple-of-128) output slab.
    out_raw = 1 + A
    out_pad = _round_up(out_raw, 128)
    w4 = jnp.pad(w4, ((0, 0), (0, out_pad - out_raw)))
    b4 = jnp.pad(b4, ((0, 0), (0, out_pad - out_raw)))

    # bf16 matmul inputs by default (MXU-native); biases stay f32.
    w1, w2, w3, w4 = (w.astype(compute_dtype) for w in (w1, w2, w3, w4))

    n1, n2, n3 = 2 * H, 128, 64
    cd_size = jnp.dtype(compute_dtype).itemsize
    out_size = jnp.dtype(out_dtype).itemsize
    x_size = x.dtype.itemsize

    # ---- Per-generation VMEM budget (v7x: 64 MiB phys -> 32 MiB scoped). ----
    try:
        vmem_cap = int(pltpu.get_tpu_info().vmem_capacity_bytes)
    except Exception:
        vmem_cap = 64 * 1024 * 1024
    vmem_limit = min(vmem_cap // 2, 64 * 1024 * 1024)

    # ---- Batch tiling / padding. ----
    align = 16                                 # bf16-friendly sublane multiple
    b_pad = _round_up(max(B, align), align)
    # Keep >= 2 grid steps whenever the batch allows it so both v7x
    # TensorCores get work under dimension_semantics=("parallel",).
    half_cap = _round_up(b_pad, 2 * align) // 2
    # Rough per-row VMEM footprint: double-buffered x/out blocks plus the
    # compiler-held f32 intermediates and their compute_dtype casts.
    bytes_per_row = (2 * d_in * x_size
                     + 2 * out_pad * out_size
                     + n1 * (4 + cd_size)
                     + n2 * (4 + cd_size)
                     + n3 * (4 + cd_size)
                     + out_pad * 4)
    vmem_cap_rows = max(align, ((vmem_limit // 2) // bytes_per_row) // align * align)

    tile = min(_round_up(int(tile_b), align), half_cap, vmem_cap_rows)
    tile = max(tile, align)
    b_padded = _round_up(b_pad, tile)
    if b_padded != B:
        x = jnp.pad(x, ((0, b_padded - B), (0, 0)))
    grid = (b_padded // tile,)

    weight_bytes = sum(int(a.size) * a.dtype.itemsize
                       for a in (w1, b1, w2, b2, w3, b3, w4, b4))
    cost = pl.CostEstimate(
        flops=2 * b_padded * (d_in * n1 + n1 * n2 + n2 * n3 + n3 * out_pad),
        transcendentals=b_padded * out_pad,
        bytes_accessed=(b_padded * (d_in * x_size + out_pad * out_size)
                        + weight_bytes),
    )

    kernel = functools.partial(_actor_critic_fused_kernel, num_actions=A)
    packed = pl.pallas_call(
        kernel,
        out_shape=jax.ShapeDtypeStruct((b_padded, out_pad), out_dtype),
        grid=grid,
        in_specs=[
            pl.BlockSpec((tile, d_in), lambda i: (i, 0)),       # x (batch-tiled)
            # Weights/biases: full-extent blocks, constant index maps ->
            # VMEM resident, no re-fetch across grid steps.
            pl.BlockSpec(w1.shape, lambda i: (0, 0)),
            pl.BlockSpec(b1.shape, lambda i: (0, 0)),
            pl.BlockSpec(w2.shape, lambda i: (0, 0)),
            pl.BlockSpec(b2.shape, lambda i: (0, 0)),
            pl.BlockSpec(w3.shape, lambda i: (0, 0)),
            pl.BlockSpec(b3.shape, lambda i: (0, 0)),
            pl.BlockSpec(w4.shape, lambda i: (0, 0)),
            pl.BlockSpec(b4.shape, lambda i: (0, 0)),
        ],
        out_specs=pl.BlockSpec((tile, out_pad), lambda i: (i, 0)),
        compiler_params=pltpu.CompilerParams(
            dimension_semantics=("parallel",),
            vmem_limit_bytes=vmem_limit,
        ),
        cost_estimate=cost,
    )(x, w1, b1, w2, b2, w3, b3, w4, b4)

    value = packed[:B, 0:1].astype(jnp.float32)
    mu = packed[:B, 1:1 + A].astype(jnp.float32)
    # std depends only on the [1, A] parameter -> compute/broadcast outside.
    std = jnp.broadcast_to(jnp.exp(params["log_std"]), mu.shape)
    return mu, std, value


def init_params(key, num_inputs_feat, num_outputs, hidden_size=256, std=0.0):
    """Deterministic synthetic parameters (PyTorch-like small init).

    Linear weights are stored [in, out] so the kernel computes x @ W + b
    (equivalent to PyTorch's x @ W.T with its [out, in] layout).
    """
    def linear(key, fan_in, fan_out):
        k_w, k_b = jax.random.split(key)
        bound = 1.0 / jnp.sqrt(jnp.float32(fan_in))
        w = jax.random.uniform(k_w, (fan_in, fan_out), jnp.float32, -bound, bound)
        b = jax.random.uniform(k_b, (1, fan_out), jnp.float32, -bound, bound)
        return w, b

    keys = jax.random.split(key, 8)
    cw1, cb1 = linear(keys[0], num_inputs_feat, hidden_size)
    cw2, cb2 = linear(keys[1], hidden_size, 64)
    cw3, cb3 = linear(keys[2], 64, 32)
    cw4, cb4 = linear(keys[3], 32, 1)
    aw1, ab1 = linear(keys[4], num_inputs_feat, hidden_size)
    aw2, ab2 = linear(keys[5], hidden_size, 64)
    aw3, ab3 = linear(keys[6], 64, 32)
    aw4, ab4 = linear(keys[7], 32, num_outputs)
    log_std = jnp.ones((1, num_outputs), jnp.float32) * std

    return dict(
        cw1=cw1, cb1=cb1, cw2=cw2, cb2=cb2, cw3=cw3, cb3=cb3, cw4=cw4, cb4=cb4,
        aw1=aw1, ab1=ab1, aw2=aw2, ab2=ab2, aw3=aw3, ab3=ab3, aw4=aw4, ab4=ab4,
        log_std=log_std,
    )


def _reference(x, p):
    """Pure-JAX reference (unfused, f32) for sanity checking."""
    def mlp(x, w1, b1, w2, b2, w3, b3, w4, b4):
        h = jnp.maximum(x @ w1 + b1, 0.0)
        h = jnp.maximum(h @ w2 + b2, 0.0)
        h = jnp.maximum(h @ w3 + b3, 0.0)
        return h @ w4 + b4

    value = mlp(x, p["cw1"], p["cb1"], p["cw2"], p["cb2"],
                p["cw3"], p["cb3"], p["cw4"], p["cb4"])
    logits = mlp(x, p["aw1"], p["ab1"], p["aw2"], p["ab2"],
                 p["aw3"], p["ab3"], p["aw4"], p["ab4"])
    mu = jax.nn.softmax(logits, axis=-1)
    std = jnp.broadcast_to(jnp.exp(p["log_std"]), mu.shape)
    return mu, std, value


if __name__ == "__main__":
    key = jax.random.PRNGKey(0)
    k_x, k_p = jax.random.split(key)

    # Small shapes consistent with the module: num_inputs=(B, 32), 4 actions.
    B, D_IN, A, HIDDEN = 8, 32, 4, 32
    x = jax.random.normal(k_x, (B, D_IN), jnp.float32)
    params = init_params(k_p, D_IN, A, hidden_size=HIDDEN, std=0.0)

    mu_ref, std_ref, value_ref = _reference(x, params)

    # Default fast path: bf16 matmul inputs + bf16 output slab.
    mu, std, value = actor_critic_forward(x, params)
    jax.block_until_ready((mu, std, value))
    assert mu.shape == (B, A) and std.shape == (B, A) and value.shape == (B, 1)
    assert jnp.allclose(mu, mu_ref, atol=5e-2, rtol=5e-2)
    assert jnp.allclose(std, std_ref, atol=1e-6, rtol=1e-6)
    assert jnp.allclose(value, value_ref, atol=5e-2, rtol=5e-2)

    # f32 path: tight correctness check of the fused kernel itself.
    mu32, std32, value32 = actor_critic_forward(
        x, params, compute_dtype=jnp.float32, out_dtype=jnp.float32)
    jax.block_until_ready((mu32, std32, value32))
    # mu uses the EUP approximate reciprocal -> slightly looser tolerance.
    assert jnp.allclose(mu32, mu_ref, atol=2e-3, rtol=2e-3)
    assert jnp.allclose(std32, std_ref, atol=1e-6, rtol=1e-6)
    assert jnp.allclose(value32, value_ref, atol=1e-5, rtol=1e-5)

    print("KERNEL_OK")
</pallas_src>

<mosaic_0001>
module attributes {stable_mosaic.version = 11 : i64} {
  func.func @_actor_critic_fused_kernel(%arg0: i32, %arg1: memref<16x32xf32, #tpu.memory_space<vmem>>, %arg2: memref<32x64xbf16, #tpu.memory_space<vmem>>, %arg3: memref<1x64xf32, #tpu.memory_space<vmem>>, %arg4: memref<64x128xbf16, #tpu.memory_space<vmem>>, %arg5: memref<1x128xf32, #tpu.memory_space<vmem>>, %arg6: memref<128x64xbf16, #tpu.memory_space<vmem>>, %arg7: memref<1x64xf32, #tpu.memory_space<vmem>>, %arg8: memref<64x128xbf16, #tpu.memory_space<vmem>>, %arg9: memref<1x128xf32, #tpu.memory_space<vmem>>, %arg10: memref<16x128xbf16, #tpu.memory_space<vmem>>) attributes {dimension_semantics = [#tpu.dimension_semantics<parallel>], iteration_bounds = array<i64: 1>, scalar_prefetch = 0 : i64, scratch_operands = 0 : i64, tpu.core_type = #tpu.core_type<tc>, window_params = [{transform_indices = @transform_0, window_bounds = array<i64: 16, 32>}, {pipeline_mode = #tpu.pipeline_mode<synchronous>, transform_indices = @transform_1, window_bounds = array<i64: 32, 64>}, {pipeline_mode = #tpu.pipeline_mode<synchronous>, transform_indices = @transform_2, window_bounds = array<i64: 1, 64>}, {pipeline_mode = #tpu.pipeline_mode<synchronous>, transform_indices = @transform_3, window_bounds = array<i64: 64, 128>}, {pipeline_mode = #tpu.pipeline_mode<synchronous>, transform_indices = @transform_4, window_bounds = array<i64: 1, 128>}, {pipeline_mode = #tpu.pipeline_mode<synchronous>, transform_indices = @transform_5, window_bounds = array<i64: 128, 64>}, {pipeline_mode = #tpu.pipeline_mode<synchronous>, transform_indices = @transform_6, window_bounds = array<i64: 1, 64>}, {pipeline_mode = #tpu.pipeline_mode<synchronous>, transform_indices = @transform_7, window_bounds = array<i64: 64, 128>}, {pipeline_mode = #tpu.pipeline_mode<synchronous>, transform_indices = @transform_8, window_bounds = array<i64: 1, 128>}, {transform_indices = @transform_9, window_bounds = array<i64: 16, 128>}]} {
    %c0 = arith.constant 0 : index
    %c0_0 = arith.constant 0 : index
    %0 = vector.load %arg1[%c0, %c0_0] : memref<16x32xf32, #tpu.memory_space<vmem>>, vector<16x32xf32>
    %1 = arith.truncf %0 : vector<16x32xf32> to vector<16x32xbf16>
    %c0_1 = arith.constant 0 : index
    %c0_2 = arith.constant 0 : index
    %2 = vector.load %arg2[%c0_1, %c0_2] : memref<32x64xbf16, #tpu.memory_space<vmem>>, vector<32x64xbf16>
    %cst = arith.constant dense<0.000000e+00> : vector<16x64xf32>
    %3 = tpu.matmul %1, %2, %cst {dimension_numbers = #tpu.dot_dimension_numbers<[1], [0], [0], [1], [0, 0, 1, 1], [], []>} : vector<16x32xbf16>, vector<32x64xbf16>, vector<16x64xf32> -> vector<16x64xf32>
    %c0_3 = arith.constant 0 : index
    %c0_4 = arith.constant 0 : index
    %4 = vector.load %arg3[%c0_3, %c0_4] : memref<1x64xf32, #tpu.memory_space<vmem>>, vector<1x64xf32>
    %5 = vector.broadcast %4 : vector<1x64xf32> to vector<16x64xf32>
    %6 = arith.addf %3, %5 : vector<16x64xf32>
    %cst_5 = arith.constant 0.000000e+00 : f32
    %7 = vector.broadcast %cst_5 : f32 to vector<16x64xf32>
    %8 = arith.maximumf %6, %7 : vector<16x64xf32>
    %9 = arith.truncf %8 : vector<16x64xf32> to vector<16x64xbf16>
    %c0_6 = arith.constant 0 : index
    %c0_7 = arith.constant 0 : index
    %10 = vector.load %arg4[%c0_6, %c0_7] : memref<64x128xbf16, #tpu.memory_space<vmem>>, vector<64x128xbf16>
    %cst_8 = arith.constant dense<0.000000e+00> : vector<16x128xf32>
    %11 = tpu.matmul %9, %10, %cst_8 {dimension_numbers = #tpu.dot_dimension_numbers<[1], [0], [0], [1], [0, 0, 1, 1], [], []>} : vector<16x64xbf16>, vector<64x128xbf16>, vector<16x128xf32> -> vector<16x128xf32>
    %c0_9 = arith.constant 0 : index
    %c0_10 = arith.constant 0 : index
    %12 = vector.load %arg5[%c0_9, %c0_10] : memref<1x128xf32, #tpu.memory_space<vmem>>, vector<1x128xf32>
    %13 = vector.broadcast %12 : vector<1x128xf32> to vector<16x128xf32>
    %14 = arith.addf %11, %13 : vector<16x128xf32>
    %cst_11 = arith.constant 0.000000e+00 : f32
    %15 = vector.broadcast %cst_11 : f32 to vector<16x128xf32>
    %16 = arith.maximumf %14, %15 : vector<16x128xf32>
    %17 = arith.truncf %16 : vector<16x128xf32> to vector<16x128xbf16>
    %c0_12 = arith.constant 0 : index
    %c0_13 = arith.constant 0 : index
    %18 = vector.load %arg6[%c0_12, %c0_13] : memref<128x64xbf16, #tpu.memory_space<vmem>>, vector<128x64xbf16>
    %cst_14 = arith.constant dense<0.000000e+00> : vector<16x64xf32>
    %19 = tpu.matmul %17, %18, %cst_14 {dimension_numbers = #tpu.dot_dimension_numbers<[1], [0], [0], [1], [0, 0, 1, 1], [], []>} : vector<16x128xbf16>, vector<128x64xbf16>, vector<16x64xf32> -> vector<16x64xf32>
    %c0_15 = arith.constant 0 : index
    %c0_16 = arith.constant 0 : index
    %20 = vector.load %arg7[%c0_15, %c0_16] : memref<1x64xf32, #tpu.memory_space<vmem>>, vector<1x64xf32>
    %21 = vector.broadcast %20 : vector<1x64xf32> to vector<16x64xf32>
    %22 = arith.addf %19, %21 : vector<16x64xf32>
    %cst_17 = arith.constant 0.000000e+00 : f32
    %23 = vector.broadcast %cst_17 : f32 to vector<16x64xf32>
    %24 = arith.maximumf %22, %23 : vector<16x64xf32>
    %25 = arith.truncf %24 : vector<16x64xf32> to vector<16x64xbf16>
    %c0_18 = arith.constant 0 : index
    %c0_19 = arith.constant 0 : index
    %26 = vector.load %arg8[%c0_18, %c0_19] : memref<64x128xbf16, #tpu.memory_space<vmem>>, vector<64x128xbf16>
    %cst_20 = arith.constant dense<0.000000e+00> : vector<16x128xf32>
    %27 = tpu.matmul %25, %26, %cst_20 {dimension_numbers = #tpu.dot_dimension_numbers<[1], [0], [0], [1], [0, 0, 1, 1], [], []>} : vector<16x64xbf16>, vector<64x128xbf16>, vector<16x128xf32> -> vector<16x128xf32>
    %c0_21 = arith.constant 0 : index
    %c0_22 = arith.constant 0 : index
    %28 = vector.load %arg9[%c0_21, %c0_22] : memref<1x128xf32, #tpu.memory_space<vmem>>, vector<1x128xf32>
    %29 = vector.broadcast %28 : vector<1x128xf32> to vector<16x128xf32>
    %30 = arith.addf %27, %29 : vector<16x128xf32>
    %31 = tpu.iota {dimensions = array<i32: 1>} : vector<16x128xi32>
    %c1_i32 = arith.constant 1 : i32
    %32 = vector.broadcast %c1_i32 : i32 to vector<16x128xi32>
    %33 = arith.cmpi sge, %31, %32 : vector<16x128xi32>
    %c4_i32 = arith.constant 4 : i32
    %34 = vector.broadcast %c4_i32 : i32 to vector<16x128xi32>
    %35 = arith.cmpi sle, %31, %34 : vector<16x128xi32>
    %36 = arith.andi %33, %35 : vector<16x128xi1>
    %cst_23 = arith.constant -1.000000e+30 : f32
    %37 = vector.broadcast %cst_23 : f32 to vector<16x128xf32>
    %38 = arith.select %36, %30, %37 : vector<16x128xi1>, vector<16x128xf32>
    %cst_24 = arith.constant dense<0xFF800000> : vector<16xf32>
    %39 = vector.multi_reduction <maximumf>, %38, %cst_24 [1] : vector<16x128xf32> to vector<16xf32>
    %40 = vector.shape_cast %39 : vector<16xf32> to vector<16x1xf32>
    %41 = vector.broadcast %40 : vector<16x1xf32> to vector<16x128xf32>
    %42 = arith.subf %38, %41 : vector<16x128xf32>
    %43 = math.exp %42 : vector<16x128xf32>
    %cst_25 = arith.constant dense<0.000000e+00> : vector<16xf32>
    %44 = vector.multi_reduction <add>, %43, %cst_25 [1] : vector<16x128xf32> to vector<16xf32>
    %45 = vector.shape_cast %44 : vector<16xf32> to vector<16x1xf32>
    %46 = tpu.reciprocal %45 {approx = true} : vector<16x1xf32> -> vector<16x1xf32>
    %47 = vector.broadcast %46 : vector<16x1xf32> to vector<16x128xf32>
    %48 = arith.mulf %43, %47 : vector<16x128xf32>
    %c0_i32 = arith.constant 0 : i32
    %49 = vector.broadcast %c0_i32 : i32 to vector<16x128xi32>
    %50 = arith.cmpi eq, %31, %49 : vector<16x128xi32>
    %51 = arith.select %50, %30, %48 : vector<16x128xi1>, vector<16x128xf32>
    %52 = arith.truncf %51 : vector<16x128xf32> to vector<16x128xbf16>
    %c0_26 = arith.constant 0 : index
    %c0_27 = arith.constant 0 : index
    %53 = vector.load %arg10[%c0_26, %c0_27] : memref<16x128xbf16, #tpu.memory_space<vmem>>, vector<16x128xbf16>
    tpu.vector_store %arg10[%c0_26, %c0_27], %52 {strides = array<i32>} : memref<16x128xbf16, #tpu.memory_space<vmem>>, vector<16x128xbf16>,
    return
  }
  func.func @transform_0(%arg0: i32) -> (i32, i32) {
    %c0_i32 = arith.constant 0 : i32
    %c0_i32_0 = arith.constant 0 : i32
    return %arg0, %c0_i32 : i32, i32
  }
  func.func @transform_1(%arg0: i32) -> (i32, i32) {
    %c0_i32 = arith.constant 0 : i32
    %c0_i32_0 = arith.constant 0 : i32
    %c0_i32_1 = arith.constant 0 : i32
    return %c0_i32, %c0_i32_0 : i32, i32
  }
  func.func @transform_2(%arg0: i32) -> (i32, i32) {
    %c0_i32 = arith.constant 0 : i32
    %c0_i32_0 = arith.constant 0 : i32
    %c0_i32_1 = arith.constant 0 : i32
    return %c0_i32, %c0_i32_0 : i32, i32
  }
  func.func @transform_3(%arg0: i32) -> (i32, i32) {
    %c0_i32 = arith.constant 0 : i32
    %c0_i32_0 = arith.constant 0 : i32
    %c0_i32_1 = arith.constant 0 : i32
    return %c0_i32, %c0_i32_0 : i32, i32
  }
  func.func @transform_4(%arg0: i32) -> (i32, i32) {
    %c0_i32 = arith.constant 0 : i32
    %c0_i32_0 = arith.constant 0 : i32
    %c0_i32_1 = arith.constant 0 : i32
    return %c0_i32, %c0_i32_0 : i32, i32
  }
  func.func @transform_5(%arg0: i32) -> (i32, i32) {
    %c0_i32 = arith.constant 0 : i32
    %c0_i32_0 = arith.constant 0 : i32
    %c0_i32_1 = arith.constant 0 : i32
    return %c0_i32, %c0_i32_0 : i32, i32
  }
  func.func @transform_6(%arg0: i32) -> (i32, i32) {
    %c0_i32 = arith.constant 0 : i32
    %c0_i32_0 = arith.constant 0 : i32
    %c0_i32_1 = arith.constant 0 : i32
    return %c0_i32, %c0_i32_0 : i32, i32
  }
  func.func @transform_7(%arg0: i32) -> (i32, i32) {
    %c0_i32 = arith.constant 0 : i32
    %c0_i32_0 = arith.constant 0 : i32
    %c0_i32_1 = arith.constant 0 : i32
    return %c0_i32, %c0_i32_0 : i32, i32
  }
  func.func @transform_8(%arg0: i32) -> (i32, i32) {
    %c0_i32 = arith.constant 0 : i32
    %c0_i32_0 = arith.constant 0 : i32
    %c0_i32_1 = arith.constant 0 : i32
    return %c0_i32, %c0_i32_0 : i32, i32
  }
  func.func @transform_9(%arg0: i32) -> (i32, i32) {
    %c0_i32 = arith.constant 0 : i32
    %c0_i32_0 = arith.constant 0 : i32
    return %arg0, %c0_i32 : i32, i32
  }
}

</mosaic_0001>

<llo_original>
// kernel: tpu_custom_call.1
$region0: #{tpu_custom_call.1}
  #allocation0 [shape = 'u32[]', space=smem, size = 0x4, offset = 0x4, fixed_abs, tag = 'smem constant byte address 0x4 - core index']
  #allocation1 [shape = 'u32[144,128]{1,0:T(1,128)}', space=vmem, size = 0x12000, scoped, tag = 'internal scratch']
  %s0 = inlined_call_operand.vmem [shape: f32[16,32], index: 0, kind: input, shape index: {}]
  %s1 = inlined_call_operand.vmem [shape: bf16[32,64], index: 1, kind: input, shape index: {}]
  %s2 = inlined_call_operand.vmem [shape: f32[1,64], index: 2, kind: input, shape index: {}]
  %s3 = inlined_call_operand.vmem [shape: bf16[64,128], index: 3, kind: input, shape index: {}]
  %s4 = inlined_call_operand.vmem [shape: f32[1,128], index: 4, kind: input, shape index: {}]
  %s5 = inlined_call_operand.vmem [shape: bf16[128,64], index: 5, kind: input, shape index: {}]
  %s6 = inlined_call_operand.vmem [shape: f32[1,64], index: 6, kind: input, shape index: {}]
  %s7 = inlined_call_operand.vmem [shape: bf16[64,128], index: 7, kind: input, shape index: {}]
  %s8 = inlined_call_operand.vmem [shape: f32[1,128], index: 8, kind: input, shape index: {}]
  %s9 = inlined_call_operand.hbm [shape: bf16[16,128], index: 9, kind: output, shape index: {}]
  %s10 = sld [smem:[#allocation0]]
  $region46: #{tpu_custom_call.1} parent=0
    _
  %s12 = ssub.s32 1, %s10
  %s13 = scalar_select 0, %s12, %s10
  $region1: #{tpu_custom_call.1} parent=0
    #allocation2 [shape = 'u8[4096]{0}', space=vmem, size = 0x1000, scoped, tag = 'output window, operand 0, single buffered']
    #allocation3 [shape = 's32[1]{0}', space=sflag, size = 0x4, scoped, tag = 'scoped memory for tpu_custom_call.1']
    %14 = vsyncpa [#allocation3], 0
    // Predicated region
    $region2: #{tpu_custom_call.1} parent=1 // pred_check
      _
    $region3: #{tpu_custom_call.1} parent=1 // pred_check_branch
      %16 = sbr.rel (0) target = $region5
    $region4: #{tpu_custom_call.1} parent=1 // pred_region
      _
    $region5: #{tpu_custom_call.1} parent=1 // pred_fallthru
      _
    // Predicated region
    $region6: #{tpu_custom_call.1} parent=1 // pred_check
      _
    $region7: #{tpu_custom_call.1} parent=1 // pred_check_branch
      %18 = sbr.rel (0) target = $region9
    $region8: #{tpu_custom_call.1} parent=1 // pred_region
      _
    $region9: #{tpu_custom_call.1} parent=1 // pred_fallthru
      _
    // Predicated region
    $region10: #{tpu_custom_call.1} parent=1 // pred_check
      _
    $region11: #{tpu_custom_call.1} parent=1 // pred_check_branch
      %20 = sbr.rel (0) target = $region13
    $region12: #{tpu_custom_call.1} parent=1 // pred_region
      _
    $region13: #{tpu_custom_call.1} parent=1 // pred_fallthru
      _
    // Predicated region
    $region14: #{tpu_custom_call.1} parent=1 // pred_check
      _
    $region15: #{tpu_custom_call.1} parent=1 // pred_check_branch
      %22 = sbr.rel (0) target = $region17
    $region16: #{tpu_custom_call.1} parent=1 // pred_region
      _
    $region17: #{tpu_custom_call.1} parent=1 // pred_fallthru
      _
    // Predicated region
    $region18: #{tpu_custom_call.1} parent=1 // pred_check
      _
    $region19: #{tpu_custom_call.1} parent=1 // pred_check_branch
      %24 = sbr.rel (0) target = $region21
    $region20: #{tpu_custom_call.1} parent=1 // pred_region
      _
    $region21: #{tpu_custom_call.1} parent=1 // pred_fallthru
      _
    // Predicated region
    $region22: #{tpu_custom_call.1} parent=1 // pred_check
      _
    $region23: #{tpu_custom_call.1} parent=1 // pred_check_branch
      %26 = sbr.rel (0) target = $region25
    $region24: #{tpu_custom_call.1} parent=1 // pred_region
      _
    $region25: #{tpu_custom_call.1} parent=1 // pred_fallthru
      _
    // Predicated region
    $region26: #{tpu_custom_call.1} parent=1 // pred_check
      _
    $region27: #{tpu_custom_call.1} parent=1 // pred_check_branch
      %28 = sbr.rel (0) target = $region29
    $region28: #{tpu_custom_call.1} parent=1 // pred_region
      _
    $region29: #{tpu_custom_call.1} parent=1 // pred_fallthru
      _
    // Predicated region
    $region30: #{tpu_custom_call.1} parent=1 // pred_check
      _
    $region31: #{tpu_custom_call.1} parent=1 // pred_check_branch
      %30 = sbr.rel (0) target = $region33
    $region32: #{tpu_custom_call.1} parent=1 // pred_region
      _
    $region33: #{tpu_custom_call.1} parent=1 // pred_fallthru
      _
    // Predicated region
    $region34: #{tpu_custom_call.1} parent=1 // pred_check
      _
    $region35: #{tpu_custom_call.1} parent=1 // pred_check_branch
      %32 = sbr.rel (0) target = $region37
    $region36: #{tpu_custom_call.1} parent=1 // pred_region
      _
    $region37: #{tpu_custom_call.1} parent=1 // pred_fallthru
      _
    %v34 = vld [vmem:[%s0] sm:$0xff]
    %v35 = vld [vmem:[%s0 + $0x8] sm:$0xff]
    %v36 = vpack.c.bf16 %v35, %v34
    %v37 = vld [vmem:[%s1] sm:$0xf]
    %v38 = vld [vmem:[%s1 + $0x4] sm:$0xf]
    %v39 = vld [vmem:[%s1 + $0x8] sm:$0xf]
    %v40 = vld [vmem:[%s1 + $0xc] sm:$0xf]
    %v41 = vld [vmem:[%s2] sm:$0x1]
    %v43 = vlaneseq
    %v44 = vshrl.u32 %v43, 7
    %v45 = vsub.s32 0, %v44
    %v46 = vrot.slane %v41, %v45
    %v52 = vunpack.c.l.b16 %v37
    %v53 = vunpack.c.l.b16 %v38
    %v54 = vunpack.c.l.b16 %v39
    %v55 = vunpack.c.l.b16 %v40
    %v56 = vpack.c.b16 %v53, %v52
    %v57 = vpack.c.b16 %v55, %v54
    %vm60 = vcmask 261120
    %v62 = vsel %vm60, %v36, 0
    %64 = vmatprep.subr.bf16.mxu0 0
    %65 = vmatpush1.bf16.msra.mxu0 0
    %66 = vmatprep.subr.bf16.mxu0 0
    %67 = vmatpush1.bf16.msra.mxu0 0
    %68 = vmatprep.subr.bf16.mxu0 0
    %69 = vmatpush1.bf16.msra.mxu0 0
    %70 = vmatprep.subr.bf16.mxu0 0
    %71 = vmatpush1.bf16.msra.mxu0 0
    %72 = vmatprep.subr.bf16.mxu0 0
    %73 = vmatpush1.bf16.msra.mxu0 0
    %74 = vmatprep.subr.bf16.mxu0 0
    %75 = vmatpush1.bf16.msra.mxu0 0
    %76 = vmatprep.subr.bf16.mxu0 0
    %77 = vmatpush1.bf16.msra.mxu0 %v57
    %78 = vmatprep.subr.bf16.mxu0 0
    %79 = vmatpush1.bf16.msra.mxu0 %v56
    %80 = vmatprep.subr.bf16.mxu0 0
    %81 = vmatpush2.bf16.msra.mxu0 0
    %82 = vmatprep.subr.bf16.mxu0 0
    %83 = vmatpush2.bf16.msra.mxu0 0
    %84 = vmatprep.subr.bf16.mxu0 0
    %85 = vmatpush2.bf16.msra.mxu0 0
    %86 = vmatprep.subr.bf16.mxu0 0
    %87 = vmatpush2.bf16.msra.mxu0 0
    %88 = vmatprep.subr.bf16.mxu0 0
    %89 = vmatpush2.bf16.msra.mxu0 0
    %90 = vmatprep.subr.bf16.mxu0 0
    %91 = vmatpush2.bf16.msra.mxu0 0
    %92 = vmatprep.subr.bf16.mxu0 0
    %93 = vmatpush2.bf16.msra.mxu0 0
    %94 = vmatprep.subr.bf16.mxu0 0
    %95 = vmatpush2.bf16.msra.mxu0 0
    %96 = vmatprep.mubr.bf16.mxu0 0
    %97 = vmatmul.mubr.bf16.gmra.mxu0 %v62
    %v98 = vpop.f32.mrf.mxu0
    %v99 = vadd.f32 %v46, %v98
    %v100 = vpop.f32.mrf.mxu0
    %v101 = vpop.f32.mrf.mxu0
    %v102 = vadd.f32 %v46, %v101
    %v103 = vpop.f32.mrf.mxu0
    %104 = vdwg.mxu0
    %v105 = vmax.f32 %v99, 0.0
    %v106 = vmax.f32 %v102, 0.0
    %v107 = vpack.c.bf16 %v106, %v105
    %v108 = vld [vmem:[%s3] sm:$0xf]
    %v109 = vld [vmem:[%s3 + $0x4] sm:$0xf]
    %v110 = vld [vmem:[%s3 + $0x8] sm:$0xf]
    %v111 = vld [vmem:[%s3 + $0xc] sm:$0xf]
    %v112 = vld [vmem:[%s3 + $0x10] sm:$0xf]
    %v113 = vld [vmem:[%s3 + $0x14] sm:$0xf]
    %v114 = vld [vmem:[%s3 + $0x18] sm:$0xf]
    %v115 = vld [vmem:[%s3 + $0x1c] sm:$0xf]
    %v116 = vld [vmem:[%s4] sm:$0x1]
    %v118 = vlaneseq
    %v119 = vshrl.u32 %v118, 7
    %v120 = vsub.s32 0, %v119
    %v121 = vrot.slane %v116, %v120
    %v131 = vunpack.c.l.b16 %v108
    %v132 = vunpack.c.l.b16 %v109
    %v133 = vunpack.c.l.b16 %v110
    %v134 = vunpack.c.l.b16 %v111
    %v135 = vunpack.c.l.b16 %v112
    %v136 = vunpack.c.l.b16 %v113
    %v137 = vunpack.c.l.b16 %v114
    %v138 = vunpack.c.l.b16 %v115
    %v139 = vpack.c.b16 %v132, %v131
    %v140 = vpack.c.b16 %v134, %v133
    %v141 = vpack.c.b16 %v136, %v135
    %v142 = vpack.c.b16 %v138, %v137
    %vm147 = vcmask 523264
    %v149 = vsel %vm147, %v107, 0
    %151 = vmatprep.subr.bf16.mxu0 0
    %152 = vmatpush1.bf16.msra.mxu0 0
    %153 = vmatprep.subr.bf16.mxu0 0
    %154 = vmatpush1.bf16.msra.mxu0 0
    %155 = vmatprep.subr.bf16.mxu0 0
    %156 = vmatpush1.bf16.msra.mxu0 0
    %157 = vmatprep.subr.bf16.mxu0 0
    %158 = vmatpush1.bf16.msra.mxu0 0
    %159 = vmatprep.subr.bf16.mxu0 0
    %160 = vmatpush1.bf16.msra.mxu0 %v142
    %161 = vmatprep.subr.bf16.mxu0 0
    %162 = vmatpush1.bf16.msra.mxu0 %v141
    %163 = vmatprep.subr.bf16.mxu0 0
    %164 = vmatpush1.bf16.msra.mxu0 %v140
    %165 = vmatprep.subr.bf16.mxu0 0
    %166 = vmatpush1.bf16.msra.mxu0 %v139
    %167 = vmatprep.subr.bf16.mxu0 0
    %168 = vmatpush2.bf16.msra.mxu0 0
    %169 = vmatprep.subr.bf16.mxu0 0
    %170 = vmatpush2.bf16.msra.mxu0 0
    %171 = vmatprep.subr.bf16.mxu0 0
    %172 = vmatpush2.bf16.msra.mxu0 0
    %173 = vmatprep.subr.bf16.mxu0 0
    %174 = vmatpush2.bf16.msra.mxu0 0
    %175 = vmatprep.subr.bf16.mxu0 0
    %176 = vmatpush2.bf16.msra.mxu0 0
    %177 = vmatprep.subr.bf16.mxu0 0
    %178 = vmatpush2.bf16.msra.mxu0 0
    %179 = vmatprep.subr.bf16.mxu0 0
    %180 = vmatpush2.bf16.msra.mxu0 0
    %181 = vmatprep.subr.bf16.mxu0 0
    %182 = vmatpush2.bf16.msra.mxu0 0
    %183 = vmatprep.mubr.bf16.mxu0 0
    %184 = vmatmul.mubr.bf16.gmra.mxu0 %v149
    %v185 = vpop.f32.mrf.mxu0
    %v186 = vadd.f32 %v121, %v185
    %v187 = vpop.f32.mrf.mxu0
    %v188 = vpop.f32.mrf.mxu0
    %v189 = vadd.f32 %v121, %v188
    %v190 = vpop.f32.mrf.mxu0
    %191 = vdwg.mxu0
    %v192 = vmax.f32 %v186, 0.0
    %v193 = vmax.f32 %v189, 0.0
    %v194 = vpack.c.bf16 %v193, %v192
    %v195 = vld [vmem:[%s5] sm:$0xf]
    %v196 = vld [vmem:[%s5 + $0x4] sm:$0xf]
    %v197 = vld [vmem:[%s5 + $0x8] sm:$0xf]
    %v198 = vld [vmem:[%s5 + $0xc] sm:$0xf]
    %v199 = vld [vmem:[%s5 + $0x10] sm:$0xf]
    %v200 = vld [vmem:[%s5 + $0x14] sm:$0xf]
    %v201 = vld [vmem:[%s5 + $0x18] sm:$0xf]
    %v202 = vld [vmem:[%s5 + $0x1c] sm:$0xf]
    %v203 = vld [vmem:[%s5 + $0x20] sm:$0xf]
    %v204 = vld [vmem:[%s5 + $0x24] sm:$0xf]
    %v205 = vld [vmem:[%s5 + $0x28] sm:$0xf]
    %v206 = vld [vmem:[%s5 + $0x2c] sm:$0xf]
    %v207 = vld [vmem:[%s5 + $0x30] sm:$0xf]
    %v208 = vld [vmem:[%s5 + $0x34] sm:$0xf]
    %v209 = vld [vmem:[%s5 + $0x38] sm:$0xf]
    %v210 = vld [vmem:[%s5 + $0x3c] sm:$0xf]
    %v211 = vld [vmem:[%s6] sm:$0x1]
    %v213 = vlaneseq
    %v214 = vshrl.u32 %v213, 7
    %v215 = vsub.s32 0, %v214
    %v216 = vrot.slane %v211, %v215
    %v234 = vunpack.c.l.b16 %v195
    %v235 = vunpack.c.l.b16 %v196
    %v236 = vunpack.c.l.b16 %v197
    %v237 = vunpack.c.l.b16 %v198
    %v238 = vunpack.c.l.b16 %v199
    %v239 = vunpack.c.l.b16 %v200
    %v240 = vunpack.c.l.b16 %v201
    %v241 = vunpack.c.l.b16 %v202
    %v242 = vunpack.c.l.b16 %v203
    %v243 = vunpack.c.l.b16 %v204
    %v244 = vunpack.c.l.b16 %v205
    %v245 = vunpack.c.l.b16 %v206
    %v246 = vunpack.c.l.b16 %v207
    %v247 = vunpack.c.l.b16 %v208
    %v248 = vunpack.c.l.b16 %v209
    %v249 = vunpack.c.l.b16 %v210
    %v250 = vpack.c.b16 %v235, %v234
    %v251 = vpack.c.b16 %v237, %v236
    %v252 = vpack.c.b16 %v239, %v238
    %v253 = vpack.c.b16 %v241, %v240
    %v254 = vpack.c.b16 %v243, %v242
    %v255 = vpack.c.b16 %v245, %v244
    %v256 = vpack.c.b16 %v247, %v246
    %v257 = vpack.c.b16 %v249, %v248
    %266 = vmatprep.subr.bf16.mxu0 0
    %267 = vmatpush1.bf16.msra.mxu0 %v257
    %268 = vmatprep.subr.bf16.mxu0 0
    %269 = vmatpush1.bf16.msra.mxu0 %v256
    %270 = vmatprep.subr.bf16.mxu0 0
    %271 = vmatpush1.bf16.msra.mxu0 %v255
    %272 = vmatprep.subr.bf16.mxu0 0
    %273 = vmatpush1.bf16.msra.mxu0 %v254
    %274 = vmatprep.subr.bf16.mxu0 0
    %275 = vmatpush1.bf16.msra.mxu0 %v253
    %276 = vmatprep.subr.bf16.mxu0 0
    %277 = vmatpush1.bf16.msra.mxu0 %v252
    %278 = vmatprep.subr.bf16.mxu0 0
    %279 = vmatpush1.bf16.msra.mxu0 %v251
    %280 = vmatprep.subr.bf16.mxu0 0
    %281 = vmatpush1.bf16.msra.mxu0 %v250
    %282 = vmatprep.subr.bf16.mxu0 0
    %283 = vmatpush2.bf16.msra.mxu0 0
    %284 = vmatprep.subr.bf16.mxu0 0
    %285 = vmatpush2.bf16.msra.mxu0 0
    %286 = vmatprep.subr.bf16.mxu0 0
    %287 = vmatpush2.bf16.msra.mxu0 0
    %288 = vmatprep.subr.bf16.mxu0 0
    %289 = vmatpush2.bf16.msra.mxu0 0
    %290 = vmatprep.subr.bf16.mxu0 0
    %291 = vmatpush2.bf16.msra.mxu0 0
    %292 = vmatprep.subr.bf16.mxu0 0
    %293 = vmatpush2.bf16.msra.mxu0 0
    %294 = vmatprep.subr.bf16.mxu0 0
    %295 = vmatpush2.bf16.msra.mxu0 0
    %296 = vmatprep.subr.bf16.mxu0 0
    %297 = vmatpush2.bf16.msra.mxu0 0
    %298 = vmatprep.mubr.bf16.mxu0 0
    %299 = vmatmul.mubr.bf16.gmra.mxu0 %v194
    %v300 = vpop.f32.mrf.mxu0
    %v301 = vadd.f32 %v216, %v300
    %v302 = vpop.f32.mrf.mxu0
    %v303 = vpop.f32.mrf.mxu0
    %v304 = vadd.f32 %v216, %v303
    %v305 = vpop.f32.mrf.mxu0
    %306 = vdwg.mxu0
    %v307 = vmax.f32 %v301, 0.0
    %v308 = vmax.f32 %v304, 0.0
    %v309 = vpack.c.bf16 %v308, %v307
    %v310 = vld [vmem:[%s7] sm:$0xf]
    %v311 = vld [vmem:[%s7 + $0x4] sm:$0xf]
    %v312 = vld [vmem:[%s7 + $0x8] sm:$0xf]
    %v313 = vld [vmem:[%s7 + $0xc] sm:$0xf]
    %v314 = vld [vmem:[%s7 + $0x10] sm:$0xf]
    %v315 = vld [vmem:[%s7 + $0x14] sm:$0xf]
    %v316 = vld [vmem:[%s7 + $0x18] sm:$0xf]
    %v317 = vld [vmem:[%s7 + $0x1c] sm:$0xf]
    %v318 = vld [vmem:[%s8] sm:$0x1]
    %v320 = vlaneseq
    %v321 = vshrl.u32 %v320, 7
    %v322 = vsub.s32 0, %v321
    %v323 = vrot.slane %v318, %v322
    %v333 = vunpack.c.l.b16 %v310
    %v334 = vunpack.c.l.b16 %v311
    %v335 = vunpack.c.l.b16 %v312
    %v336 = vunpack.c.l.b16 %v313
    %v337 = vunpack.c.l.b16 %v314
    %v338 = vunpack.c.l.b16 %v315
    %v339 = vunpack.c.l.b16 %v316
    %v340 = vunpack.c.l.b16 %v317
    %v341 = vpack.c.b16 %v334, %v333
    %v342 = vpack.c.b16 %v336, %v335
    %v343 = vpack.c.b16 %v338, %v337
    %v344 = vpack.c.b16 %v340, %v339
    %v350 = vsel %vm147, %v309, 0
    %352 = vmatprep.subr.bf16.mxu0 0
    %353 = vmatpush1.bf16.msra.mxu0 0
    %354 = vmatprep.subr.bf16.mxu0 0
    %355 = vmatpush1.bf16.msra.mxu0 0
    %356 = vmatprep.subr.bf16.mxu0 0
    %357 = vmatpush1.bf16.msra.mxu0 0
    %358 = vmatprep.subr.bf16.mxu0 0
    %359 = vmatpush1.bf16.msra.mxu0 0
    %360 = vmatprep.subr.bf16.mxu0 0
    %361 = vmatpush1.bf16.msra.mxu0 %v344
    %362 = vmatprep.subr.bf16.mxu0 0
    %363 = vmatpush1.bf16.msra.mxu0 %v343
    %364 = vmatprep.subr.bf16.mxu0 0
    %365 = vmatpush1.bf16.msra.mxu0 %v342
    %366 = vmatprep.subr.bf16.mxu0 0
    %367 = vmatpush1.bf16.msra.mxu0 %v341
    %368 = vmatprep.subr.bf16.mxu0 0
    %369 = vmatpush2.bf16.msra.mxu0 0
    %370 = vmatprep.subr.bf16.mxu0 0
    %371 = vmatpush2.bf16.msra.mxu0 0
    %372 = vmatprep.subr.bf16.mxu0 0
    %373 = vmatpush2.bf16.msra.mxu0 0
    %374 = vmatprep.subr.bf16.mxu0 0
    %375 = vmatpush2.bf16.msra.mxu0 0
    %376 = vmatprep.subr.bf16.mxu0 0
    %377 = vmatpush2.bf16.msra.mxu0 0
    %378 = vmatprep.subr.bf16.mxu0 0
    %379 = vmatpush2.bf16.msra.mxu0 0
    %380 = vmatprep.subr.bf16.mxu0 0
    %381 = vmatpush2.bf16.msra.mxu0 0
    %382 = vmatprep.subr.bf16.mxu0 0
    %383 = vmatpush2.bf16.msra.mxu0 0
    %384 = vmatprep.mubr.bf16.mxu0 0
    %385 = vmatmul.mubr.bf16.gmra.mxu0 %v350
    %v386 = vpop.f32.mrf.mxu0
    %v387 = vadd.f32 %v323, %v386
    %v388 = vpop.f32.mrf.mxu0
    %v389 = vpop.f32.mrf.mxu0
    %v390 = vadd.f32 %v323, %v389
    %v391 = vpop.f32.mrf.mxu0
    %392 = vdwg.mxu0
    %v393 = vlaneseq
    %v394 = vand.u32 %v393, 127
    %vm395 = vcmp.ge.s32.totalorder %v394, 1
    %vm396 = vcmp.le.s32.totalorder %v394, 4
    %vm397 = vmand %vm395, %vm396
    %v398 = vsel %vm397, %v387, -1e+30
    %v399 = vsel %vm397, %v390, -1e+30
    %400 = vmax.xlane.f32.xlu0 %v398
    %v401 = vpop.xlane.xlu0 %400
    %402 = vmax.xlane.f32.xlu0 %v399
    %v403 = vpop.xlane.xlu0 %402
    %v404 = vsub.f32 %v398, %v401
    %v405 = vsub.f32 %v399, %v403
    %v406 = vmul.f32 %v404, 1.442695
    %v407 = vpow.pop %v406
    %v408 = vmul.f32 %v405, 1.442695
    %v409 = vpow.pop %v408
    %410 = vadd.xlane.f32.xlu0 %v407
    %v411 = vpop.xlane.xlu0 %410
    %412 = vadd.xlane.f32.xlu0 %v409
    %v413 = vpop.xlane.xlu0 %412
    %v414 = vrcp.pop %v411
    %v415 = vrcp.pop %v413
    %v416 = vmul.f32 %v407, %v414
    %v417 = vmul.f32 %v409, %v415
    %vm418 = vcmp.eq.s32.totalorder %v394, 0
    %v419 = vsel %vm418, %v387, %v416
    %v420 = vsel %vm418, %v390, %v417
    %v421 = vpack.c.bf16 %v420, %v419
    %v423 = vunpack.c.l.b16 %v421
    %v424 = vunpack.c.h.b16 %v421
    %v425 = vpack.c.b16 %v423, %v423
    %v426 = vpack.c.b16 %v424, %v424
    %429 = vst [vmem:[#allocation2] sm:$0xf] %v425
    %430 = vst [vmem:[#allocation2 + $0x4] sm:$0xf] %v426
    // Predicated region
    $region38: #{tpu_custom_call.1} parent=1 // pred_check
      _
    $region39: #{tpu_custom_call.1} parent=1 // pred_check_branch
      %432 = sbr.rel (0) target = $region41
    $region40: #{tpu_custom_call.1} parent=1 // pred_region
      %s434 = ssub.s32 128, 128
      %435 = vsyncadd [#allocation3], %s434
      %s436 = sshll.u32 [#allocation2], 4
      %s437 = int_to_ptr.vmem [resolvable:$true] %s436
      %442 = dma.vmem_to_hbm [thread:$0]  %s437, 128, %s9, [#allocation3], 64, 64, 4
    $region41: #{tpu_custom_call.1} parent=1 // pred_fallthru
      _
    // Predicated region
    $region42: #{tpu_custom_call.1} parent=1 // pred_check
      _
    $region43: #{tpu_custom_call.1} parent=1 // pred_check_branch
      %444 = sbr.rel (0) target = $region45
    $region44: #{tpu_custom_call.1} parent=1 // pred_region
      %445 = dma.done [#allocation3], 128
    $region45: #{tpu_custom_call.1} parent=1 // pred_fallthru
      _
    %446 = vsyncpa [#allocation3], 1

</llo_original>
